<compile_context>
chip_gen: v6e
topology: v6e:2x2x1
jax: 0.10.0
libtpu: 0.0.40
codegen_flags: <defaults>
</compile_context>

<pallas_src>
import functools
import math

import jax
import jax.numpy as jnp
from jax.experimental import pallas as pl
from jax.experimental.pallas import tpu as pltpu


def _round_up(x, m):
    return ((x + m - 1) // m) * m


def _sublane_multiple(dtype):
    # sublane packing: f32 -> 8, bf16 -> 16, int8/fp8 -> 32
    return {4: 8, 2: 16, 1: 32}.get(jnp.dtype(dtype).itemsize, 8)


def _vmem_capacity_bytes():
    """Physical VMEM per TensorCore; conservative 64 MiB fallback (v7x)."""
    try:
        info = pltpu.get_tpu_info()
        for attr in ("vmem_capacity_bytes", "vmem_size_bytes", "vmem_bytes"):
            v = getattr(info, attr, None)
            if v:
                return int(v)
    except Exception:
        pass
    return 64 << 20


def _pick_tile(dim, align, max_tile):
    """Choose (tile, padded_dim).

    tile is a multiple of `align`, <= max_tile, and divides padded_dim.
    Prefer no padding beyond the `align` rounding; accept extra padding only
    when it is small (<= 1/8 of the dim) or the divisor-based tile is tiny.
    """
    padded = _round_up(dim, align)
    if padded <= max_tile:
        return padded, padded
    best = align
    for t in range(align, max_tile + 1, align):
        if padded % t == 0:
            best = t
    padded_max = _round_up(dim, max_tile)
    if best < max_tile and (padded_max - padded) * 8 <= padded:
        return max_tile, padded_max
    if best * 4 < max_tile:
        return max_tile, padded_max
    return best, padded


def _make_kernel(multi_k, w_kn, has_bias):
    """Build the kernel body for a given (K-split, W-layout, bias) variant.

    w_kn=False : W tile is (tn, tk)  [nn.Linear layout], contract dim 1/1.
    w_kn=True  : W tile is (tk, tn)  [pre-transposed],   contract dim 1/0.
    """
    dn = (((1,), (0,)), ((), ())) if w_kn else (((1,), (1,)), ((), ()))

    if multi_k:
        def kernel(*refs):
            if has_bias:
                x_ref, w_ref, b_ref, y_ref, o_ref, acc_ref = refs
            else:
                x_ref, w_ref, y_ref, o_ref, acc_ref = refs
            k = pl.program_id(2)

            @pl.when(k == 0)
            def _():
                if has_bias:
                    # Seed the accumulator with the bias -> no epilogue add.
                    acc_ref[...] = jnp.broadcast_to(
                        b_ref[...].astype(jnp.float32), acc_ref.shape)
                else:
                    acc_ref[...] = jnp.zeros_like(acc_ref)

            acc_ref[...] += jax.lax.dot_general(
                x_ref[...], w_ref[...],
                dimension_numbers=dn,
                preferred_element_type=jnp.float32)

            @pl.when(k == pl.num_programs(2) - 1)
            def _():
                o_ref[...] = (acc_ref[...] *
                              y_ref[...].astype(jnp.float32)).astype(o_ref.dtype)
    else:
        def kernel(*refs):
            if has_bias:
                x_ref, w_ref, b_ref, y_ref, o_ref = refs
            else:
                x_ref, w_ref, y_ref, o_ref = refs
            acc = jax.lax.dot_general(
                x_ref[...], w_ref[...],
                dimension_numbers=dn,
                preferred_element_type=jnp.float32)
            if has_bias:
                acc = acc + b_ref[...].astype(jnp.float32)
            o_ref[...] = (acc * y_ref[...].astype(jnp.float32)).astype(o_ref.dtype)

    return kernel


def prepare_weight_kn(weight):
    """One-time weight prep: nn.Linear [N, K] -> [K, N].

    Call once at weight-load time and pass the result with w_layout="kn" so
    repeated (prefill-sized) linear_mul calls never pay a per-call weight
    transpose / relayout HBM pass.
    """
    return jnp.asarray(weight).T


@functools.partial(jax.jit, static_argnames=("w_layout", "tm", "tn", "tk"))
def linear_mul(x, weight, bias, y, *, w_layout="nk", tm=None, tn=None, tk=None):
    """Fused (x @ W^T + bias) * y   (== _IPEXlinearMulCPU.forward, tpp=False).

    x:      [..., K]   (any leading dims)
    weight: [N, K] if w_layout == "nk" (nn.Linear layout)
            [K, N] if w_layout == "kn" (see prepare_weight_kn)
    bias:   [N] or None
    y:      [..., N]   (same leading dims as x)
    """
    if w_layout not in ("nk", "kn"):
        raise ValueError("w_layout must be 'nk' or 'kn'")
    w_kn = w_layout == "kn"

    *lead, K = x.shape
    N = y.shape[-1]
    M = math.prod(lead) if lead else 1
    out_dtype = x.dtype
    itemsize = jnp.dtype(out_dtype).itemsize
    has_bias = bias is not None

    if w_kn:
        assert weight.shape == (K, N), "w_layout='kn' expects weight [K, N]"
    else:
        assert weight.shape == (N, K), "w_layout='nk' expects weight [N, K]"

    x2 = x.reshape(M, K)
    y2 = y.reshape(M, N)

    # ---- VMEM budget (generation-aware) --------------------------------------
    vmem_cap = _vmem_capacity_bytes()          # 64 MiB (v7x) .. 128 MiB (v5e/v6e)
    tile_budget = int(vmem_cap * 0.72)         # ~28% headroom for Mosaic scratch

    # ---- tile selection (lane-dense, budget-driven) --------------------------
    m_align = _sublane_multiple(out_dtype)
    # 256-aligned tiles keep the 256x256 MXU (v6e/v7x) full; only use them when
    # they add no padding (pure 128-multiples otherwise, incl. v5e's 128x128 MXU).
    n_align = 256 if (N >= 256 and N % 256 == 0) else 128
    k_align = 256 if (K >= 256 and K % 256 == 0) else 128

    # Validate user-supplied tiles against dtype sublane / lane multiples.
    if tm is not None:
        tm = _round_up(tm, m_align)
    if tn is not None:
        tn = _round_up(tn, 128)
    if tk is not None:
        tk = _round_up(tk, 128)
    tm_user, tn_user, tk_user = tm, tn, tk

    def vmem_needed(tm_, tn_, tk_):
        return (2 * (tm_ * tk_ + tn_ * tk_ + tm_ * tn_ + 8 * tn_) * itemsize
                + 2 * tm_ * tn_ * itemsize      # double-buffered output
                + tm_ * tn_ * 4)                # fp32 accumulator

    max_tm, max_tn, max_tk = 512, 1024, 1024
    while True:
        if tm_user is None:
            tm, Mp = _pick_tile(M, m_align, max_tm)
        else:
            tm, Mp = tm_user, _round_up(M, tm_user)
        if tn_user is None:
            tn, Np = _pick_tile(N, n_align, max_tn)
        else:
            tn, Np = tn_user, _round_up(N, tn_user)
        if tk_user is None:
            tk, Kp = _pick_tile(K, k_align, max_tk)
        else:
            tk, Kp = tk_user, _round_up(K, tk_user)
        if vmem_needed(tm, tn, tk) <= tile_budget:
            break
        if tk_user is None and max_tk > 256:
            max_tk //= 2
        elif tn_user is None and max_tn > 256:
            max_tn //= 2
        elif tm_user is None and max_tm > 8 * m_align:
            max_tm //= 2
        else:
            break

    # Dual-TensorCore (v7x) heuristic: guarantee >= 2 (i, j) blocks by
    # splitting N first, then M (only when tiles were auto-selected).
    if tm_user is None and tn_user is None:
        while (Mp // tm) * (Np // tn) < 2:
            if (tn // 2) >= 128 and (tn // 2) % 128 == 0 and Np % (tn // 2) == 0:
                tn //= 2
            elif (tm // 2) >= m_align and Mp % (tm // 2) == 0:
                tm //= 2
            else:
                break

    # ---- pad operands so every tile is full (unmasked, lane-dense stores) ----
    # TODO(synk): pads are conditional (no-op for aligned shapes); a caller that
    # pre-pads W/x/y at prep time pays zero per-call HBM passes here.
    if (Mp, Kp) != (M, K):
        x2 = jnp.pad(x2, ((0, Mp - M), (0, Kp - K)))
    w = weight
    if w_kn:
        if (Kp, Np) != w.shape:
            w = jnp.pad(w, ((0, Kp - K), (0, Np - N)))
    else:
        if (Np, Kp) != w.shape:
            w = jnp.pad(w, ((0, Np - N), (0, Kp - K)))
    if has_bias:
        b2 = bias.reshape(1, N)
        if Np != N:
            b2 = jnp.pad(b2, ((0, 0), (0, Np - N)))
    if (Mp, Np) != (M, N):
        y2 = jnp.pad(y2, ((0, Mp - M), (0, Np - N)))

    gi, gj, nk = Mp // tm, Np // tn, Kp // tk
    multi_k = nk > 1
    kernel = _make_kernel(multi_k, w_kn, has_bias)

    # ---- specs ----------------------------------------------------------------
    if multi_k:
        x_spec = pl.BlockSpec((tm, tk), lambda i, j, k: (i, k))
        if w_kn:
            w_spec = pl.BlockSpec((tk, tn), lambda i, j, k: (k, j))
        else:
            w_spec = pl.BlockSpec((tn, tk), lambda i, j, k: (j, k))
        b_spec = pl.BlockSpec((1, tn), lambda i, j, k: (0, j))
        y_spec = pl.BlockSpec((tm, tn), lambda i, j, k: (i, j))
        o_spec = pl.BlockSpec((tm, tn), lambda i, j, k: (i, j))
        grid = (gi, gj, nk)
        dim_sem = ("parallel", "parallel", "arbitrary")
        scratch = [pltpu.VMEM((tm, tn), jnp.float32)]
    else:
        x_spec = pl.BlockSpec((tm, tk), lambda i, j: (i, 0))
        if w_kn:
            w_spec = pl.BlockSpec((tk, tn), lambda i, j: (0, j))
        else:
            w_spec = pl.BlockSpec((tn, tk), lambda i, j: (j, 0))
        b_spec = pl.BlockSpec((1, tn), lambda i, j: (0, j))
        y_spec = pl.BlockSpec((tm, tn), lambda i, j: (i, j))
        o_spec = pl.BlockSpec((tm, tn), lambda i, j: (i, j))
        grid = (gi, gj)
        dim_sem = ("parallel", "parallel")
        scratch = []

    in_specs = [x_spec, w_spec] + ([b_spec] if has_bias else []) + [y_spec]
    args = [x2, w] + ([b2] if has_bias else []) + [y2]

    vneed = vmem_needed(tm, tn, tk)
    vmem_limit = int(min(vmem_cap * 0.85, max(32 << 20, 2 * vneed)))

    cost = pl.CostEstimate(
        flops=2 * Mp * Np * Kp,
        transcendentals=0,
        # x is re-streamed once per j block, W once per i block.
        bytes_accessed=(Mp * Kp * gj + Np * Kp * gi + 2 * Mp * Np
                        + (Np if has_bias else 0)) * itemsize,
    )

    grid_spec = pltpu.PrefetchScalarGridSpec(
        num_scalar_prefetch=0,
        grid=grid,
        in_specs=in_specs,
        out_specs=o_spec,
        scratch_shapes=scratch,
    )

    out2 = pl.pallas_call(
        kernel,
        out_shape=jax.ShapeDtypeStruct((Mp, Np), out_dtype),
        grid_spec=grid_spec,
        compiler_params=pltpu.CompilerParams(
            dimension_semantics=dim_sem,
            vmem_limit_bytes=vmem_limit,
        ),
        cost_estimate=cost,
    )(*args)

    out2 = out2[:M, :N]
    return out2.reshape(*lead, N)


if __name__ == "__main__":
    key = jax.random.PRNGKey(0)
    kx, ky, kw, kb, kx2, ky2, kw2, kb2 = jax.random.split(key, 8)

    # ---- Case 1: small module-like shapes (single-K fast path, bias, "nk"). --
    B, S, IN, OUT = 2, 8, 32, 64
    x = jax.random.normal(kx, (B, S, IN), dtype=jnp.float32)
    y = jax.random.normal(ky, (B, S, OUT), dtype=jnp.float32)
    weight = jax.random.normal(kw, (OUT, IN), dtype=jnp.float32) * 0.05
    bias = jax.random.normal(kb, (OUT,), dtype=jnp.float32) * 0.05

    out = jax.block_until_ready(linear_mul(x, weight, bias, y))
    ref = (jnp.einsum("bsk,nk->bsn", x, weight) + bias) * y
    assert out.shape == (B, S, OUT)
    assert jnp.allclose(out, ref, atol=1e-4, rtol=1e-4), "case1 mismatch"

    # ---- Case 2: K-accumulation path + pre-transposed weight ("kn"), bias. ---
    B2, S2, IN2, OUT2 = 2, 64, 256, 256
    x_b = jax.random.normal(kx2, (B2, S2, IN2), dtype=jnp.float32)
    y_b = jax.random.normal(ky2, (B2, S2, OUT2), dtype=jnp.float32)
    w_b = jax.random.normal(kw2, (OUT2, IN2), dtype=jnp.float32) * 0.02
    b_b = jax.random.normal(kb2, (OUT2,), dtype=jnp.float32) * 0.02

    w_kn = prepare_weight_kn(w_b)  # one-time prep: [N, K] -> [K, N]
    out_b = jax.block_until_ready(
        linear_mul(x_b, w_kn, b_b, y_b, w_layout="kn", tm=128, tn=128, tk=128)
    )
    ref_b = (jnp.einsum("bsk,nk->bsn", x_b, w_b) + b_b) * y_b
    assert out_b.shape == (B2, S2, OUT2)
    assert jnp.allclose(out_b, ref_b, atol=1e-3, rtol=1e-3), "case2 mismatch"

    # ---- Case 3: bias=None variant (no bias DMA / add in the kernel). --------
    out_nb = jax.block_until_ready(linear_mul(x, weight, None, y))
    ref_nb = jnp.einsum("bsk,nk->bsn", x, weight) * y
    assert jnp.allclose(out_nb, ref_nb, atol=1e-4, rtol=1e-4), "case3 mismatch"

    print("KERNEL_OK")
</pallas_src>

<mosaic_0001>
module attributes {stable_mosaic.version = 11 : i64} {
  func.func @kernel(%arg0: i32, %arg1: i32, %arg2: memref<8x128xf32, #tpu.memory_space<vmem>>, %arg3: memref<128x128xf32, #tpu.memory_space<vmem>>, %arg4: memref<1x128xf32, #tpu.memory_space<vmem>>, %arg5: memref<8x128xf32, #tpu.memory_space<vmem>>, %arg6: memref<8x128xf32, #tpu.memory_space<vmem>>) attributes {dimension_semantics = [#tpu.dimension_semantics<parallel>, #tpu.dimension_semantics<parallel>], iteration_bounds = array<i64: 2, 1>, scalar_prefetch = 0 : i64, scratch_operands = 0 : i64, tpu.core_type = #tpu.core_type<tc>, window_params = [{transform_indices = @transform_0, window_bounds = array<i64: 8, 128>}, {transform_indices = @transform_1, window_bounds = array<i64: 128, 128>}, {transform_indices = @transform_2, window_bounds = array<i64: 1, 128>}, {transform_indices = @transform_3, window_bounds = array<i64: 8, 128>}, {transform_indices = @transform_4, window_bounds = array<i64: 8, 128>}]} {
    %c0 = arith.constant 0 : index
    %c0_0 = arith.constant 0 : index
    %0 = vector.load %arg2[%c0, %c0_0] : memref<8x128xf32, #tpu.memory_space<vmem>>, vector<8x128xf32>
    %c0_1 = arith.constant 0 : index
    %c0_2 = arith.constant 0 : index
    %1 = vector.load %arg3[%c0_1, %c0_2] : memref<128x128xf32, #tpu.memory_space<vmem>>, vector<128x128xf32>
    %cst = arith.constant dense<0.000000e+00> : vector<8x128xf32>
    %2 = tpu.matmul %0, %1, %cst {dimension_numbers = #tpu.dot_dimension_numbers<[1], [1], [0], [0], [0, 0, 1, 0], [], []>} : vector<8x128xf32>, vector<128x128xf32>, vector<8x128xf32> -> vector<8x128xf32>
    %c0_3 = arith.constant 0 : index
    %c0_4 = arith.constant 0 : index
    %3 = vector.load %arg4[%c0_3, %c0_4] : memref<1x128xf32, #tpu.memory_space<vmem>>, vector<1x128xf32>
    %4 = vector.broadcast %3 : vector<1x128xf32> to vector<8x128xf32>
    %5 = arith.addf %2, %4 : vector<8x128xf32>
    %c0_5 = arith.constant 0 : index
    %c0_6 = arith.constant 0 : index
    %6 = vector.load %arg5[%c0_5, %c0_6] : memref<8x128xf32, #tpu.memory_space<vmem>>, vector<8x128xf32>
    %7 = arith.mulf %5, %6 : vector<8x128xf32>
    %c0_7 = arith.constant 0 : index
    %c0_8 = arith.constant 0 : index
    %8 = vector.load %arg6[%c0_7, %c0_8] : memref<8x128xf32, #tpu.memory_space<vmem>>, vector<8x128xf32>
    tpu.vector_store %arg6[%c0_7, %c0_8], %7 {strides = array<i32>} : memref<8x128xf32, #tpu.memory_space<vmem>>, vector<8x128xf32>,
    return
  }
  func.func @transform_0(%arg0: i32, %arg1: i32) -> (i32, i32) {
    %c0_i32 = arith.constant 0 : i32
    %c0_i32_0 = arith.constant 0 : i32
    return %arg0, %c0_i32 : i32, i32
  }
  func.func @transform_1(%arg0: i32, %arg1: i32) -> (i32, i32) {
    %c0_i32 = arith.constant 0 : i32
    %c0_i32_0 = arith.constant 0 : i32
    return %arg1, %c0_i32 : i32, i32
  }
  func.func @transform_2(%arg0: i32, %arg1: i32) -> (i32, i32) {
    %c0_i32 = arith.constant 0 : i32
    %c0_i32_0 = arith.constant 0 : i32
    return %c0_i32, %arg1 : i32, i32
  }
  func.func @transform_3(%arg0: i32, %arg1: i32) -> (i32, i32) {
    %c0_i32 = arith.constant 0 : i32
    return %arg0, %arg1 : i32, i32
  }
  func.func @transform_4(%arg0: i32, %arg1: i32) -> (i32, i32) {
    %c0_i32 = arith.constant 0 : i32
    return %arg0, %arg1 : i32, i32
  }
}

</mosaic_0001>

<llo_original>
// kernel: linear_mul.1
$region0: #{linear_mul.1}
  #allocation0 [shape = 'u32[]', space=smem, size = 0x4, offset = 0x4, fixed_abs, tag = 'smem constant byte address 0x4 - core index']
  #allocation1 [shape = 'u32[144,128]{1,0:T(1,128)}', space=vmem, size = 0x12000, scoped, tag = 'internal scratch']
  %s0 = inlined_call_operand.vmem [shape: f32[16,128], index: 0, kind: input, shape index: {}]
  %s1 = inlined_call_operand.vmem [shape: f32[128,128], index: 1, kind: input, shape index: {}]
  %s2 = inlined_call_operand.vmem [shape: f32[1,128], index: 2, kind: input, shape index: {}]
  %s3 = inlined_call_operand.vmem [shape: f32[16,128], index: 3, kind: input, shape index: {}]
  %s4 = inlined_call_operand.vmem [shape: f32[16,128], index: 4, kind: output, shape index: {}]
  %s5 = sld [smem:[#allocation0]]
  $region49: #{linear_mul.1} parent=0
    _
  %s7 = ssub.s32 1, %s5
  %s8 = scalar_select 0, %s7, %s5
  loop: start=0, step=1, limit=4
  $region2: #{linear_mul.1} parent=0 // loop_pre_header
    _
  $region3: #{linear_mul.1} parent=0 // loop_header
    %s10 = sphi 0, %s14
    %p11 = scmp.ge.s32.totalorder %s10, 4
    %s17 = sphi 0, %s29
    %s18 = sphi 0, %s25
    %s19 = sphi 0, %s17
    %s20 = sphi 0, %s18
    %s21 = sphi 0, %s19
    %s22 = sphi 0, %s20
    %s32 = sphi 0, %s34
    %s35 = sphi 0, %s32
    %s36 = sphi 0, %s35
    %s52 = sphi 0, %s36
    %s58 = sphi 0, %s60
    %s61 = sphi 0, %s58
    %s62 = sphi 0, %s61
    %s78 = sphi 0, %s62
    %s84 = sphi 0, %s86
    %s87 = sphi 0, %s84
    %s88 = sphi 0, %s87
    %s104 = sphi 0, %s88
    %s112 = sphi 0, %s114
    %s115 = sphi 0, %s112
    %s116 = sphi 0, %s115
    %s132 = sphi 0, %s116
    %s140 = sphi 0, %s142
    %s143 = sphi 0, %s140
    %s144 = sphi 0, %s143
    %s160 = sphi 0, %s144
  $region4: #{linear_mul.1} parent=0 // loop_header_branch
    %13 = sbr.rel (%p11) target = $region8
  $region5: #{linear_mul.1} parent=0 // loop_body
    %s15 = ssub.s32 %s10, 1
    %s16 = ssub.s32 %s10, 2
    %s23 = sadd.s32 1, %s18
    %p24 = scmp.ge.s32.totalorder %s23, 1
    %s25 = scalar_select %p24, 0, %s23
    %s26 = sadd.s32 1, %s17
    %s27 = scalar_select %p24, %s26, %s17
    %p28 = scmp.ge.s32.totalorder %s27, 2
    %s29 = scalar_select %p28, 0, %s27
    %s30 = ssub.s32 %s17, %s29
    %p31 = scmp.eq.s32.totalorder %s30, 0
    %s33 = sadd.s32 %s32, 1
    %s34 = scalar_select %p31, %s32, %s33
    %p37 = pneg %p31
    %p38 = scmp.eq.s32.totalorder %s10, 1
    %p39 = por %p37, %p38
    %p40 = scmp.ne.s32.totalorder %s32, %s35
    %p41 = scmp.eq.s32.totalorder %s10, 0
    %p42 = por %p40, %p41
    %p43 = scmp.ne.s32.totalorder %s32, %s35
    %p44 = scmp.eq.s32.totalorder %s15, 1
    %p45 = por %p43, %p44
    %p46 = scmp.ne.s32.totalorder %s35, %s36
    %p47 = scmp.eq.s32.totalorder %s15, 0
    %p48 = por %p46, %p47
    %p49 = scmp.ne.s32.totalorder %s35, %s36
    %p50 = scmp.eq.s32.totalorder %s16, 1
    %p51 = por %p49, %p50
    %p53 = scmp.ne.s32.totalorder %s36, %s52
    %p54 = scmp.eq.s32.totalorder %s16, 0
    %p55 = por %p53, %p54
    %s56 = ssub.s32 %s18, %s25
    %p57 = scmp.eq.s32.totalorder %s56, 0
    %s59 = sadd.s32 %s58, 1
    %s60 = scalar_select %p57, %s58, %s59
    %p63 = pneg %p57
    %p64 = scmp.eq.s32.totalorder %s10, 1
    %p65 = por %p63, %p64
    %p66 = scmp.ne.s32.totalorder %s58, %s61
    %p67 = scmp.eq.s32.totalorder %s10, 0
    %p68 = por %p66, %p67
    %p69 = scmp.ne.s32.totalorder %s58, %s61
    %p70 = scmp.eq.s32.totalorder %s15, 1
    %p71 = por %p69, %p70
    %p72 = scmp.ne.s32.totalorder %s61, %s62
    %p73 = scmp.eq.s32.totalorder %s15, 0
    %p74 = por %p72, %p73
    %p75 = scmp.ne.s32.totalorder %s61, %s62
    %p76 = scmp.eq.s32.totalorder %s16, 1
    %p77 = por %p75, %p76
    %p79 = scmp.ne.s32.totalorder %s62, %s78
    %p80 = scmp.eq.s32.totalorder %s16, 0
    %p81 = por %p79, %p80
    %s82 = ssub.s32 %s18, %s25
    %p83 = scmp.eq.s32.totalorder %s82, 0
    %s85 = sadd.s32 %s84, 1
    %s86 = scalar_select %p83, %s84, %s85
    %p89 = pneg %p83
    %p90 = scmp.eq.s32.totalorder %s10, 1
    %p91 = por %p89, %p90
    %p92 = scmp.ne.s32.totalorder %s84, %s87
    %p93 = scmp.eq.s32.totalorder %s10, 0
    %p94 = por %p92, %p93
    %p95 = scmp.ne.s32.totalorder %s84, %s87
    %p96 = scmp.eq.s32.totalorder %s15, 1
    %p97 = por %p95, %p96
    %p98 = scmp.ne.s32.totalorder %s87, %s88
    %p99 = scmp.eq.s32.totalorder %s15, 0
    %p100 = por %p98, %p99
    %p101 = scmp.ne.s32.totalorder %s87, %s88
    %p102 = scmp.eq.s32.totalorder %s16, 1
    %p103 = por %p101, %p102
    %p105 = scmp.ne.s32.totalorder %s88, %s104
    %p106 = scmp.eq.s32.totalorder %s16, 0
    %p107 = por %p105, %p106
    %s108 = ssub.s32 %s17, %s29
    %s109 = ssub.s32 %s18, %s25
    %s110 = sor.u32 %s108, %s109
    %p111 = scmp.eq.s32.totalorder %s110, 0
    %s113 = sadd.s32 %s112, 1
    %s114 = scalar_select %p111, %s112, %s113
    %p117 = pneg %p111
    %p118 = scmp.eq.s32.totalorder %s10, 1
    %p119 = por %p117, %p118
    %p120 = scmp.ne.s32.totalorder %s112, %s115
    %p121 = scmp.eq.s32.totalorder %s10, 0
    %p122 = por %p120, %p121
    %p123 = scmp.ne.s32.totalorder %s112, %s115
    %p124 = scmp.eq.s32.totalorder %s15, 1
    %p125 = por %p123, %p124
    %p126 = scmp.ne.s32.totalorder %s115, %s116
    %p127 = scmp.eq.s32.totalorder %s15, 0
    %p128 = por %p126, %p127
    %p129 = scmp.ne.s32.totalorder %s115, %s116
    %p130 = scmp.eq.s32.totalorder %s16, 1
    %p131 = por %p129, %p130
    %p133 = scmp.ne.s32.totalorder %s116, %s132
    %p134 = scmp.eq.s32.totalorder %s16, 0
    %p135 = por %p133, %p134
    %s136 = ssub.s32 %s17, %s29
    %s137 = ssub.s32 %s18, %s25
    %s138 = sor.u32 %s136, %s137
    %p139 = scmp.eq.s32.totalorder %s138, 0
    %s141 = sadd.s32 %s140, 1
    %s142 = scalar_select %p139, %s140, %s141
    %p145 = pneg %p139
    %p146 = scmp.eq.s32.totalorder %s10, 1
    %p147 = por %p145, %p146
    %p148 = scmp.ne.s32.totalorder %s140, %s143
    %p149 = scmp.eq.s32.totalorder %s10, 0
    %p150 = por %p148, %p149
    %p151 = scmp.ne.s32.totalorder %s140, %s143
    %p152 = scmp.eq.s32.totalorder %s15, 1
    %p153 = por %p151, %p152
    %p154 = scmp.ne.s32.totalorder %s143, %s144
    %p155 = scmp.eq.s32.totalorder %s15, 0
    %p156 = por %p154, %p155
    %p157 = scmp.ne.s32.totalorder %s143, %s144
    %p158 = scmp.eq.s32.totalorder %s16, 1
    %p159 = por %p157, %p158
    %p161 = scmp.ne.s32.totalorder %s144, %s160
    %p162 = scmp.eq.s32.totalorder %s16, 0
    %p163 = por %p161, %p162
    %p164 = scmp.le.s32.totalorder 1, %s10
    %p165 = scmp.lt.s32.totalorder %s10, 3
    %p166 = pnand %p164, %p165
    %p167 = pneg %p166
    // Predicated region
    $region9: #{linear_mul.1} parent=5 // pred_check
      _
    $region10: #{linear_mul.1} parent=5 // pred_check_branch
      %169 = sbr.rel (%p166) target = $region12
    $region11: #{linear_mul.1} parent=5 // pred_region
      %s170 = ssub.s32 %s10, 1
      // Predicated region
      $region13: #{linear_mul.1} parent=11 // pred_check
        %p171 = pneg %p74
      $region14: #{linear_mul.1} parent=11 // pred_check_branch
        %173 = sbr.rel (%p171) target = $region16
      $region15: #{linear_mul.1} parent=11 // pred_region
        %s174 = smul.u32 16, %s20
        %p175 = scmp.lt.s32.totalorder %s174, 15
        %s176 = scalar_select %p175, %s174, 15
        %s177 = smul.addr %s176, 8
        %s178 = scalar_lea.vmem %s1, %s177
        %s179 = smul.u32 16, %s20
      $region16: #{linear_mul.1} parent=11 // pred_fallthru
        _
      // Predicated region
      $region17: #{linear_mul.1} parent=11 // pred_check
        %p180 = pneg %p100
      $region18: #{linear_mul.1} parent=11 // pred_check_branch
        %182 = sbr.rel (%p180) target = $region20
      $region19: #{linear_mul.1} parent=11 // pred_region
        %p183 = scmp.lt.s32.totalorder %s20, 0
        %s184 = scalar_select %p183, %s20, 0
        %s185 = scalar_lea.vmem %s2, %s184
      $region20: #{linear_mul.1} parent=11 // pred_fallthru
        _
    $region12: #{linear_mul.1} parent=5 // pred_fallthru
      _
    %p186 = scmp.lt.s32.totalorder %s10, 2
    // Predicated region
    $region21: #{linear_mul.1} parent=5 // pred_check
      %p187 = pneg %p186
    $region22: #{linear_mul.1} parent=5 // pred_check_branch
      %189 = sbr.rel (%p187) target = $region24
    $region23: #{linear_mul.1} parent=5 // pred_region
      // Predicated region
      $region25: #{linear_mul.1} parent=23 // pred_check
        %p190 = pneg %p42
      $region26: #{linear_mul.1} parent=23 // pred_check_branch
        %192 = sbr.rel (%p190) target = $region28
      $region27: #{linear_mul.1} parent=23 // pred_region
        %p193 = scmp.lt.s32.totalorder %s17, 1
        %s194 = scalar_select %p193, %s17, 1
        %s195 = smul.addr %s194, 8
        %s196 = scalar_lea.vmem %s0, %s195
      $region28: #{linear_mul.1} parent=23 // pred_fallthru
        _
      // Predicated region
      $region29: #{linear_mul.1} parent=23 // pred_check
        %p197 = pneg %p122
      $region30: #{linear_mul.1} parent=23 // pred_check_branch
        %199 = sbr.rel (%p197) target = $region32
      $region31: #{linear_mul.1} parent=23 // pred_region
        %p200 = scmp.lt.s32.totalorder %s17, 1
        %s201 = scalar_select %p200, %s17, 1
        %p202 = scmp.lt.s32.totalorder %s18, 0
        %s203 = scalar_select %p202, %s18, 0
        %s204 = sadd.s32 %s203, %s201
        %s205 = smul.addr %s204, 8
        %s206 = scalar_lea.vmem %s3, %s205
      $region32: #{linear_mul.1} parent=23 // pred_fallthru
        _
    $region24: #{linear_mul.1} parent=5 // pred_fallthru
      _
    %p207 = scmp.le.s32.totalorder 1, %s10
    %p208 = scmp.lt.s32.totalorder %s10, 3
    %p209 = pnand %p207, %p208
    %p210 = pneg %p209
    // Predicated region
    $region33: #{linear_mul.1} parent=5 // pred_check
      _
    $region34: #{linear_mul.1} parent=5 // pred_check_branch
      %212 = sbr.rel (%p209) target = $region36
    $region35: #{linear_mul.1} parent=5 // pred_region
      %s213 = ssub.s32 %s10, 1
      %p214 = scmp.lt.s32.totalorder %s19, 1
      %s215 = scalar_select %p214, %s19, 1
      %s216 = smul.addr %s215, 8
      %s217 = scalar_lea.vmem %s0, %s216
      %p218 = pneg %p48
      %p219 = pneg %p45
      %s220 = smul.u32 16, %s20
      %p221 = scmp.lt.s32.totalorder %s220, 15
      %s222 = scalar_select %p221, %s220, 15
      %s223 = smul.addr %s222, 8
      %s224 = scalar_lea.vmem %s1, %s223
      %p225 = pneg %p74
      %p226 = pneg %p71
      %p227 = scmp.lt.s32.totalorder %s20, 0
      %s228 = scalar_select %p227, %s20, 0
      %s229 = scalar_lea.vmem %s2, %s228
      %p230 = pneg %p100
      %p231 = pneg %p97
      %p232 = scmp.lt.s32.totalorder %s19, 1
      %s233 = scalar_select %p232, %s19, 1
      %p234 = scmp.lt.s32.totalorder %s20, 0
      %s235 = scalar_select %p234, %s20, 0
      %s236 = sadd.s32 %s235, %s233
      %s237 = smul.addr %s236, 8
      %s238 = scalar_lea.vmem %s3, %s237
      %p239 = pneg %p128
      %p240 = pneg %p125
      %p241 = pneg %p156
      %p242 = pneg %p153
      %p243 = scmp.lt.s32.totalorder %s19, 1
      %s244 = scalar_select %p243, %s19, 1
      %p245 = scmp.lt.s32.totalorder %s20, 0
      %s246 = scalar_select %p245, %s20, 0
      %s247 = sadd.s32 %s246, %s244
      %s248 = smul.addr %s247, 8
      %s249 = scalar_lea.vmem %s4, %s248
      %p250 = scmp.lt.s32.totalorder %s19, 1
      %s251 = scalar_select %p250, %s19, 1
      %s252 = smul.addr %s251, 8
      %s253 = scalar_lea.vmem %s0, %s252
      %s254 = smul.u32 16, %s20
      %p255 = scmp.lt.s32.totalorder %s254, 15
      %s256 = scalar_select %p255, %s254, 15
      %s257 = smul.addr %s256, 8
      %s258 = scalar_lea.vmem %s1, %s257
      %s259 = smul.u32 16, %s20
      %p260 = scmp.lt.s32.totalorder %s20, 0
      %s261 = scalar_select %p260, %s20, 0
      %s262 = scalar_lea.vmem %s2, %s261
      %p263 = scmp.lt.s32.totalorder %s19, 1
      %s264 = scalar_select %p263, %s19, 1
      %p265 = scmp.lt.s32.totalorder %s20, 0
      %s266 = scalar_select %p265, %s20, 0
      %s267 = sadd.s32 %s266, %s264
      %s268 = smul.addr %s267, 8
      %s269 = scalar_lea.vmem %s3, %s268
      %p270 = scmp.lt.s32.totalorder %s19, 1
      %s271 = scalar_select %p270, %s19, 1
      %p272 = scmp.lt.s32.totalorder %s20, 0
      %s273 = scalar_select %p272, %s20, 0
      %s274 = sadd.s32 %s273, %s271
      %s275 = smul.addr %s274, 8
      %s276 = scalar_lea.vmem %s4, %s275
      %v277 = vld [vmem:[%s253] sm:$0xff]
      %v278 = vld [vmem:[%s258] sm:$0xff]
      %v279 = vld [vmem:[%s258 + $0x8] sm:$0xff]
      %v280 = vld [vmem:[%s258 + $0x10] sm:$0xff]
      %v281 = vld [vmem:[%s258 + $0x18] sm:$0xff]
      %v282 = vld [vmem:[%s258 + $0x20] sm:$0xff]
      %v283 = vld [vmem:[%s258 + $0x28] sm:$0xff]
      %v284 = vld [vmem:[%s258 + $0x30] sm:$0xff]
      %v285 = vld [vmem:[%s258 + $0x38] sm:$0xff]
      %v286 = vld [vmem:[%s258 + $0x40] sm:$0xff]
      %v287 = vld [vmem:[%s258 + $0x48] sm:$0xff]
      %v288 = vld [vmem:[%s258 + $0x50] sm:$0xff]
      %v289 = vld [vmem:[%s258 + $0x58] sm:$0xff]
      %v290 = vld [vmem:[%s258 + $0x60] sm:$0xff]
      %v291 = vld [vmem:[%s258 + $0x68] sm:$0xff]
      %v292 = vld [vmem:[%s258 + $0x70] sm:$0xff]
      %v293 = vld [vmem:[%s258 + $0x78] sm:$0xff]
      %v294 = vld [vmem:[%s262] sm:$0x1]
      %v296 = vlaneseq
      %v297 = vshrl.u32 %v296, 7
      %v298 = vsub.s32 0, %v297
      %v299 = vrot.slane %v294, %v298
      %301 = vmatprep.subr.mxu0 0.0
      %302 = vmatpush1.xpose.msra.mxu0 %v293
      %303 = vmatprep.subr.mxu0 0.0
      %304 = vmatpush1.xpose.msra.mxu0 %v292
      %305 = vmatprep.subr.mxu0 0.0
      %306 = vmatpush1.xpose.msra.mxu0 %v291
      %307 = vmatprep.subr.mxu0 0.0
      %308 = vmatpush1.xpose.msra.mxu0 %v290
      %309 = vmatprep.subr.mxu0 0.0
      %310 = vmatpush1.xpose.msra.mxu0 %v289
      %311 = vmatprep.subr.mxu0 0.0
      %312 = vmatpush1.xpose.msra.mxu0 %v288
      %313 = vmatprep.subr.mxu0 0.0
      %314 = vmatpush1.xpose.msra.mxu0 %v287
      %315 = vmatprep.subr.mxu0 0.0
      %316 = vmatpush1.xpose.msra.mxu0 %v286
      %317 = vmatprep.subr.mxu0 0.0
      %318 = vmatpush1.xpose.msra.mxu0 %v285
      %319 = vmatprep.subr.mxu0 0.0
      %320 = vmatpush1.xpose.msra.mxu0 %v284
      %321 = vmatprep.subr.mxu0 0.0
      %322 = vmatpush1.xpose.msra.mxu0 %v283
      %323 = vmatprep.subr.mxu0 0.0
      %324 = vmatpush1.xpose.msra.mxu0 %v282
      %325 = vmatprep.subr.mxu0 0.0
      %326 = vmatpush1.xpose.msra.mxu0 %v281
      %327 = vmatprep.subr.mxu0 0.0
      %328 = vmatpush1.xpose.msra.mxu0 %v280
      %329 = vmatprep.subr.mxu0 0.0
      %330 = vmatpush1.xpose.msra.mxu0 %v279
      %331 = vmatprep.subr.mxu0 0.0
      %332 = vmatpush1.xpose.msra.mxu0 %v278
      %333 = vmatprep.subr.mxu0 0.0
      %334 = vmatpush2.xpose.msra.mxu0 0.0
      %335 = vmatprep.subr.mxu0 0.0
      %336 = vmatpush2.xpose.msra.mxu0 0.0
      %337 = vmatprep.subr.mxu0 0.0
      %338 = vmatpush2.xpose.msra.mxu0 0.0
      %339 = vmatprep.subr.mxu0 0.0
      %340 = vmatpush2.xpose.msra.mxu0 0.0
      %341 = vmatprep.subr.mxu0 0.0
      %342 = vmatpush2.xpose.msra.mxu0 0.0
      %343 = vmatprep.subr.mxu0 0.0
      %344 = vmatpush2.xpose.msra.mxu0 0.0
      %345 = vmatprep.subr.mxu0 0.0
      %346 = vmatpush2.xpose.msra.mxu0 0.0
      %347 = vmatprep.subr.mxu0 0.0
      %348 = vmatpush2.xpose.msra.mxu0 0.0
      %349 = vmatprep.subr.mxu0 0.0
      %350 = vmatpush2.xpose.msra.mxu0 0.0
      %351 = vmatprep.subr.mxu0 0.0
      %352 = vmatpush2.xpose.msra.mxu0 0.0
      %353 = vmatprep.subr.mxu0 0.0
      %354 = vmatpush2.xpose.msra.mxu0 0.0
      %355 = vmatprep.subr.mxu0 0.0
      %356 = vmatpush2.xpose.msra.mxu0 0.0
      %357 = vmatprep.subr.mxu0 0.0
      %358 = vmatpush2.xpose.msra.mxu0 0.0
      %359 = vmatprep.subr.mxu0 0.0
      %360 = vmatpush2.xpose.msra.mxu0 0.0
      %361 = vmatprep.subr.mxu0 0.0
      %362 = vmatpush2.xpose.msra.mxu0 0.0
      %363 = vmatprep.subr.mxu0 0.0
      %364 = vmatpush2.xpose.msra.mxu0 0.0
      %365 = vmatprep.mubr.f32.mxu0 0.0
      %366 = vmatmul.mubr.f32.gmra.mxu0 %v277
      %v367 = vpop.f32.mrf.mxu0
      %v368 = vadd.f32 %v299, %v367
      %v369 = vpop.f32.mrf.mxu0
      %370 = vdwg.mxu0
      %v371 = vld [vmem:[%s269] sm:$0xff]
      %v372 = vmul.f32 %v368, %v371
      %373 = vst [vmem:[%s276] sm:$0xff] %v372
      %p374 = scmp.lt.s32.totalorder %s19, 1
      %s375 = scalar_select %p374, %s19, 1
      %p376 = scmp.lt.s32.totalorder %s20, 0
      %s377 = scalar_select %p376, %s20, 0
      %s378 = sadd.s32 %s377, %s375
      %s379 = smul.addr %s378, 8
      %s380 = scalar_lea.vmem %s4, %s379
      // Predicated region
      $region37: #{linear_mul.1} parent=35 // pred_check
        %p381 = pneg %p153
      $region38: #{linear_mul.1} parent=35 // pred_check_branch
        %383 = sbr.rel (%p381) target = $region40
      $region39: #{linear_mul.1} parent=35 // pred_region
        _
      $region40: #{linear_mul.1} parent=35 // pred_fallthru
        _
    $region36: #{linear_mul.1} parent=5 // pred_fallthru
      _
    %p384 = scmp.le.s32.totalorder 2, %s10
    // Predicated region
    $region41: #{linear_mul.1} parent=5 // pred_check
      %p385 = pneg %p384
    $region42: #{linear_mul.1} parent=5 // pred_check_branch
      %387 = sbr.rel (%p385) target = $region44
    $region43: #{linear_mul.1} parent=5 // pred_region
      %s388 = ssub.s32 %s10, 2
      // Predicated region
      $region45: #{linear_mul.1} parent=43 // pred_check
        %p389 = pneg %p159
      $region46: #{linear_mul.1} parent=43 // pred_check_branch
        %391 = sbr.rel (%p389) target = $region48
      $region47: #{linear_mul.1} parent=43 // pred_region
        %p392 = scmp.lt.s32.totalorder %s21, 1
        %s393 = scalar_select %p392, %s21, 1
        %p394 = scmp.lt.s32.totalorder %s22, 0
        %s395 = scalar_select %p394, %s22, 0
        %s396 = sadd.s32 %s395, %s393
        %s397 = smul.addr %s396, 8
        %s398 = scalar_lea.vmem %s4, %s397
      $region48: #{linear_mul.1} parent=43 // pred_fallthru
        _
    $region44: #{linear_mul.1} parent=5 // pred_fallthru
      _
  $region6: #{linear_mul.1} parent=0 // loop_footer
    %s14 = sadd.s32 1, %s10
  $region7: #{linear_mul.1} parent=0 // loop_footer_branch
    %9 = sbr.rel target = $region3
  $region8: #{linear_mul.1} parent=0 // loop_exit
    _

</llo_original>
